<compile_context>
chip_gen: v7x
topology: tpu7x:2x2x1
jax: 0.10.0
libtpu: 0.0.40
codegen_flags: <defaults>
</compile_context>

<pallas_src>
import functools

import jax
import jax.numpy as jnp
from jax.experimental import pallas as pl
from jax.experimental.pallas import tpu as pltpu


# ---------------------------------------------------------------------------
# Kernel 1: K / V projection (runs once per batch over the memory tokens).
# ---------------------------------------------------------------------------
def _kv_proj_kernel(mem_ref, wk, bk, wv, bv, k_out, v_out):
    mem = mem_ref[0]                                          # (tkv, C)
    k = jnp.dot(mem, wk[...], preferred_element_type=jnp.float32) + bk[...]
    v = jnp.dot(mem, wv[...], preferred_element_type=jnp.float32) + bv[...]
    k_out[0] = k.astype(k_out.dtype)
    v_out[0] = v.astype(v_out.dtype)


# ---------------------------------------------------------------------------
# Kernel 2: flash attention over precomputed K/V + out-proj + LN + MLP.
# ---------------------------------------------------------------------------
def _mem_attn_kernel(num_heads, head_dim, exp_dtype,
                     q_in, k_in, v_in,
                     wq, bq, wo, bo, g2, beta2, w1, b1, w2, b2,
                     out_ref,
                     q_scr, acc_scr, m_scr, l_scr):
    H, D = num_heads, head_dim
    km = pl.program_id(2)
    n_kv = pl.num_programs(2)
    cdtype = q_in.dtype
    scale = 1.0 / (D ** 0.5)

    # ---- first KV tile for this (batch, query tile): project Q, reset stats.
    @pl.when(km == 0)
    def _init():
        x = q_in[0]                                           # (tn, C)
        qp = jnp.dot(x, wq[...], preferred_element_type=jnp.float32) + bq[...]
        q_scr[...] = (qp * scale).astype(q_scr.dtype)         # one full-width dot
        m_scr[...] = jnp.full(m_scr.shape, -jnp.inf, dtype=m_scr.dtype)
        l_scr[...] = jnp.zeros(l_scr.shape, dtype=l_scr.dtype)
        acc_scr[...] = jnp.zeros(acc_scr.shape, dtype=acc_scr.dtype)

    # ---- online-softmax update with this KV tile (per-head 2-D MXU dots).
    q_full = q_scr[...]                                       # (tn, C)
    k_tile = k_in[0]                                          # (tm, C)
    v_tile = v_in[0]                                          # (tm, C)
    for h in range(H):                                        # static unroll (H small)
        qh = q_full[:, h * D:(h + 1) * D]                     # (tn, D)
        kh = k_tile[:, h * D:(h + 1) * D]                     # (tm, D)
        vh = v_tile[:, h * D:(h + 1) * D]                     # (tm, D)
        # contract over head_dim; K tile is never materialized transposed
        s = jax.lax.dot_general(
            qh, kh, dimension_numbers=(((1,), (1,)), ((), ())),
            preferred_element_type=jnp.float32)               # (tn, tm)
        m_prev = m_scr[h]                                     # (tn, 1) f32
        m_new = jnp.maximum(m_prev, jnp.max(s, axis=-1, keepdims=True))
        alpha = jnp.exp(m_prev - m_new)                       # f32, tiny
        p = jnp.exp((s - m_new).astype(exp_dtype))            # bf16 exp on v6e/v7x
        l_scr[h] = alpha * l_scr[h] + jnp.sum(
            p.astype(jnp.float32), axis=-1, keepdims=True)    # f32 row sums
        acc_scr[h] = alpha * acc_scr[h] + jnp.dot(
            p.astype(cdtype), vh, preferred_element_type=jnp.float32)
        m_scr[h] = m_new

    # ---- last KV tile: normalize, out-proj, residual, LayerNorm, MLP.
    @pl.when(km == n_kv - 1)
    def _finalize():
        parts = []
        for h in range(H):
            inv_l = pl.reciprocal(l_scr[h], approx=True)      # EUP slot
            parts.append((acc_scr[h] * inv_l).astype(cdtype)) # (tn, D)
        attn_cat = parts[0] if H == 1 else jnp.concatenate(parts, axis=-1)
        o = jnp.dot(attn_cat, wo[...],
                    preferred_element_type=jnp.float32) + bo[...]   # one (tn,C)@(C,C)
        x1 = q_in[0].astype(jnp.float32) + o                  # residual 1

        # LayerNorm (norm2, eps=1e-5, biased variance — PyTorch semantics)
        mu = jnp.mean(x1, axis=-1, keepdims=True)
        var = jnp.mean((x1 - mu) ** 2, axis=-1, keepdims=True)
        xn = (x1 - mu) * jax.lax.rsqrt(var + 1e-5) * g2[...] + beta2[...]

        # MLP: Linear -> ReLU -> Linear, plus residual 2
        mlp_h = jnp.dot(xn.astype(cdtype), w1[...],
                        preferred_element_type=jnp.float32) + b1[...]
        mlp_h = jnp.maximum(mlp_h, 0.0)
        mlp_o = jnp.dot(mlp_h.astype(cdtype), w2[...],
                        preferred_element_type=jnp.float32) + b2[...]
        out_ref[0] = (x1 + mlp_o).astype(out_ref.dtype)


# ---------------------------------------------------------------------------
# Wrapper
# ---------------------------------------------------------------------------
def _pick_tile(total, cap):
    for t in (1024, 512, 256, 128, 64, 32, 16, 8):
        if t <= cap and total % t == 0:
            return t
    return total          # full extent — always a legal block size


def _const_spec(arr):
    nd = arr.ndim
    return pl.BlockSpec(arr.shape, lambda *_, _nd=nd: (0,) * _nd)


def memory_attention_block(queries, memory, params, num_heads, *,
                           tn=None, tm=None, tkv=None, exp_in_bf16=None):
    """queries: (B, N, C), memory: (B, M, C). Returns (B, N, C)."""
    B, N, C = queries.shape
    _, M, _ = memory.shape
    assert C % num_heads == 0, "embedding_dim must be divisible by num_heads"
    H = num_heads
    D = C // H
    F = params["w1"].shape[1]
    cdtype = queries.dtype

    # Tiles: big enough to amortize per-step overhead, small enough for v7x.
    tn = _pick_tile(N, 512) if tn is None else tn
    tm = _pick_tile(M, 1024) if tm is None else tm
    tkv = _pick_tile(M, 512) if tkv is None else tkv
    assert N % tn == 0 and M % tm == 0 and M % tkv == 0
    assert tn == N or tn % 8 == 0
    assert tm == M or tm % 8 == 0
    assert tkv == M or tkv % 8 == 0

    # VMEM budget: 3/4 of physical, capped at 96 MiB (=> 48 MiB on v7x).
    try:
        vmem_phys = pltpu.get_tpu_info().vmem_capacity_bytes
    except Exception:  # optional HW query only; never guards the kernel build
        vmem_phys = 128 * 1024 * 1024
    vmem_limit = int(min(96 * 1024 * 1024, (vmem_phys * 3) // 4))

    # exp in bf16 only when computing in bf16 (v6e/v7x EUP win). Set
    # exp_in_bf16=False explicitly on v5e if feeding bf16 inputs there.
    if exp_in_bf16 is None:
        exp_in_bf16 = (jnp.dtype(cdtype) == jnp.dtype(jnp.bfloat16))
    exp_dtype = jnp.bfloat16 if exp_in_bf16 else jnp.float32

    itemsize = jnp.dtype(cdtype).itemsize
    wbytes = lambda arrs: sum(int(a.size) * jnp.dtype(a.dtype).itemsize
                              for a in arrs)

    # ------------------------- kernel 1: K/V projection --------------------
    kv_weights = [params["wk"], params["bk"].reshape(1, C),
                  params["wv"], params["bv"].reshape(1, C)]
    kv_cost = pl.CostEstimate(
        flops=int(4 * B * M * C * C),
        transcendentals=0,
        bytes_accessed=int(3 * B * M * C * itemsize + wbytes(kv_weights)))
    k_arr, v_arr = pl.pallas_call(
        _kv_proj_kernel,
        out_shape=(jax.ShapeDtypeStruct((B, M, C), cdtype),
                   jax.ShapeDtypeStruct((B, M, C), cdtype)),
        grid_spec=pltpu.PrefetchScalarGridSpec(
            num_scalar_prefetch=0,
            grid=(B, M // tkv),
            in_specs=[pl.BlockSpec((1, tkv, C), lambda b, m: (b, m, 0))]
                     + [_const_spec(w) for w in kv_weights],
            out_specs=[pl.BlockSpec((1, tkv, C), lambda b, m: (b, m, 0))] * 2,
        ),
        compiler_params=pltpu.CompilerParams(
            dimension_semantics=("parallel", "parallel"),
            vmem_limit_bytes=vmem_limit),
        cost_estimate=kv_cost,
    )(memory, *kv_weights)

    # ------------------------- kernel 2: attention + MLP -------------------
    main_weights = [
        params["wq"], params["bq"].reshape(1, C),
        params["wo"], params["bo"].reshape(1, C),
        params["g2"].reshape(1, C), params["beta2"].reshape(1, C),
        params["w1"], params["b1"].reshape(1, F),
        params["w2"], params["b2"].reshape(1, C),
    ]
    n_qt = N // tn
    main_cost = pl.CostEstimate(
        flops=int(B * (4 * N * C * C + 4 * N * M * C + 4 * N * C * F)),
        transcendentals=int(B * H * N * M + B * H * N * (M // tm) + 2 * B * N),
        bytes_accessed=int(itemsize * (2 * B * N * C + 2 * n_qt * B * M * C)
                           + wbytes(main_weights)))

    kernel = functools.partial(_mem_attn_kernel, H, D, exp_dtype)
    grid_spec = pltpu.PrefetchScalarGridSpec(
        num_scalar_prefetch=0,
        grid=(B, N // tn, M // tm),
        in_specs=[
            pl.BlockSpec((1, tn, C), lambda b, n, k: (b, n, 0)),   # queries
            pl.BlockSpec((1, tm, C), lambda b, n, k: (b, k, 0)),   # K (precomputed)
            pl.BlockSpec((1, tm, C), lambda b, n, k: (b, k, 0)),   # V (precomputed)
        ] + [_const_spec(w) for w in main_weights],
        out_specs=pl.BlockSpec((1, tn, C), lambda b, n, k: (b, n, 0)),
        scratch_shapes=[
            pltpu.VMEM((tn, C), cdtype),           # scaled projected Q
            pltpu.VMEM((H, tn, D), jnp.float32),   # flash accumulator
            pltpu.VMEM((H, tn, 1), jnp.float32),   # running max
            pltpu.VMEM((H, tn, 1), jnp.float32),   # running sum
        ])
    return pl.pallas_call(
        kernel,
        out_shape=jax.ShapeDtypeStruct((B, N, C), cdtype),
        grid_spec=grid_spec,
        compiler_params=pltpu.CompilerParams(
            dimension_semantics=("parallel", "parallel", "arbitrary"),
            vmem_limit_bytes=vmem_limit),
        cost_estimate=main_cost,
    )(queries, k_arr, v_arr, *main_weights)


# ---------------------------------------------------------------------------
# Pure-JAX reference and parameter init (for the self-test).
# ---------------------------------------------------------------------------
def reference_forward(queries, memory, params, num_heads):
    B, N, C = queries.shape
    M = memory.shape[1]
    D = C // num_heads

    q = queries @ params["wq"] + params["bq"]
    k = memory @ params["wk"] + params["bk"]
    v = memory @ params["wv"] + params["bv"]

    q = q.reshape(B, N, num_heads, D).transpose(0, 2, 1, 3)
    k = k.reshape(B, M, num_heads, D).transpose(0, 2, 1, 3)
    v = v.reshape(B, M, num_heads, D).transpose(0, 2, 1, 3)

    attn = jnp.einsum("bhnd,bhmd->bhnm", q, k) / (D ** 0.5)
    attn = jax.nn.softmax(attn, axis=-1)
    out = jnp.einsum("bhnm,bhmd->bhnd", attn, v)
    out = out.transpose(0, 2, 1, 3).reshape(B, N, C)
    out = out @ params["wo"] + params["bo"]

    x = queries + out
    mu = jnp.mean(x, axis=-1, keepdims=True)
    var = jnp.mean((x - mu) ** 2, axis=-1, keepdims=True)
    xn = (x - mu) / jnp.sqrt(var + 1e-5) * params["g2"] + params["beta2"]
    h = jnp.maximum(xn @ params["w1"] + params["b1"], 0.0)
    return x + (h @ params["w2"] + params["b2"])


def init_params(key, embedding_dim, mlp_dim):
    C, F = embedding_dim, mlp_dim
    keys = jax.random.split(key, 12)
    s = 0.02
    return {
        "wq": jax.random.normal(keys[0], (C, C), jnp.float32) * s,
        "bq": jax.random.normal(keys[1], (C,), jnp.float32) * s,
        "wk": jax.random.normal(keys[2], (C, C), jnp.float32) * s,
        "bk": jax.random.normal(keys[3], (C,), jnp.float32) * s,
        "wv": jax.random.normal(keys[4], (C, C), jnp.float32) * s,
        "bv": jax.random.normal(keys[5], (C,), jnp.float32) * s,
        "wo": jax.random.normal(keys[6], (C, C), jnp.float32) * s,
        "bo": jax.random.normal(keys[7], (C,), jnp.float32) * s,
        "g2": jnp.ones((C,), jnp.float32),
        "beta2": jnp.zeros((C,), jnp.float32),
        "w1": jax.random.normal(keys[8], (C, F), jnp.float32) * s,
        "b1": jax.random.normal(keys[9], (F,), jnp.float32) * s,
        "w2": jax.random.normal(keys[10], (F, C), jnp.float32) * s,
        "b2": jax.random.normal(keys[11], (C,), jnp.float32) * s,
    }


if __name__ == "__main__":
    B, N, M, C = 2, 16, 32, 32
    num_heads = 4
    mlp_dim = 64

    key = jax.random.PRNGKey(0)
    kq, kmem, kp = jax.random.split(key, 3)
    queries = jax.random.normal(kq, (B, N, C), jnp.float32)
    memory = jax.random.normal(kmem, (B, M, C), jnp.float32)
    params = init_params(kp, C, mlp_dim)

    # Small tiles so the (B, N-tile, KV-tile) grid, the KV-projection grid and
    # the online-softmax accumulation across KV tiles are all exercised.
    out = memory_attention_block(queries, memory, params, num_heads,
                                 tn=8, tm=8, tkv=16)
    out = jax.block_until_ready(out)

    ref = reference_forward(queries, memory, params, num_heads)
    if not jnp.allclose(out, ref, atol=5e-3, rtol=5e-3):
        err = float(jnp.max(jnp.abs(out - ref)))
        raise AssertionError(f"fp32 Pallas output mismatch (max abs err {err:.3e})")

    # bf16 smoke test: bf16 MXU operands + bf16 exp, f32 accumulation / stats.
    q16 = queries.astype(jnp.bfloat16)
    m16 = memory.astype(jnp.bfloat16)
    p16 = {k: v.astype(jnp.bfloat16) for k, v in params.items()}
    out16 = memory_attention_block(q16, m16, p16, num_heads, tn=8, tm=8, tkv=16)
    out16 = jax.block_until_ready(out16)
    if not jnp.allclose(out16.astype(jnp.float32), ref, atol=0.25, rtol=0.25):
        raise AssertionError("bf16 Pallas output diverges from fp32 reference")

    print("KERNEL_OK")
</pallas_src>

<mosaic_0001>
module attributes {stable_mosaic.version = 11 : i64} {
  func.func @_kv_proj_kernel(%arg0: i32, %arg1: i32, %arg2: memref<1x16x32xf32, #tpu.memory_space<vmem>>, %arg3: memref<32x32xf32, #tpu.memory_space<vmem>>, %arg4: memref<1x32xf32, #tpu.memory_space<vmem>>, %arg5: memref<32x32xf32, #tpu.memory_space<vmem>>, %arg6: memref<1x32xf32, #tpu.memory_space<vmem>>, %arg7: memref<1x16x32xf32, #tpu.memory_space<vmem>>, %arg8: memref<1x16x32xf32, #tpu.memory_space<vmem>>) attributes {dimension_semantics = [#tpu.dimension_semantics<parallel>, #tpu.dimension_semantics<parallel>], iteration_bounds = array<i64: 2, 2>, scalar_prefetch = 0 : i64, scratch_operands = 0 : i64, tpu.core_type = #tpu.core_type<tc>, window_params = [{transform_indices = @transform_0, window_bounds = array<i64: 1, 16, 32>}, {pipeline_mode = #tpu.pipeline_mode<synchronous>, transform_indices = @transform_1, window_bounds = array<i64: 32, 32>}, {pipeline_mode = #tpu.pipeline_mode<synchronous>, transform_indices = @transform_2, window_bounds = array<i64: 1, 32>}, {pipeline_mode = #tpu.pipeline_mode<synchronous>, transform_indices = @transform_3, window_bounds = array<i64: 32, 32>}, {pipeline_mode = #tpu.pipeline_mode<synchronous>, transform_indices = @transform_4, window_bounds = array<i64: 1, 32>}, {transform_indices = @transform_5, window_bounds = array<i64: 1, 16, 32>}, {transform_indices = @transform_6, window_bounds = array<i64: 1, 16, 32>}]} {
    %c0 = arith.constant 0 : index
    %c0_0 = arith.constant 0 : index
    %c0_1 = arith.constant 0 : index
    %0 = vector.load %arg2[%c0, %c0_0, %c0_1] : memref<1x16x32xf32, #tpu.memory_space<vmem>>, vector<1x16x32xf32>
    %1 = vector.shape_cast %0 : vector<1x16x32xf32> to vector<16x32xf32>
    %c0_2 = arith.constant 0 : index
    %c0_3 = arith.constant 0 : index
    %2 = vector.load %arg3[%c0_2, %c0_3] : memref<32x32xf32, #tpu.memory_space<vmem>>, vector<32x32xf32>
    %cst = arith.constant dense<0.000000e+00> : vector<16x32xf32>
    %3 = tpu.matmul %1, %2, %cst {dimension_numbers = #tpu.dot_dimension_numbers<[1], [0], [0], [1], [0, 0, 1, 1], [], []>} : vector<16x32xf32>, vector<32x32xf32>, vector<16x32xf32> -> vector<16x32xf32>
    %c0_4 = arith.constant 0 : index
    %c0_5 = arith.constant 0 : index
    %4 = vector.load %arg4[%c0_4, %c0_5] : memref<1x32xf32, #tpu.memory_space<vmem>>, vector<1x32xf32>
    %5 = vector.broadcast %4 : vector<1x32xf32> to vector<16x32xf32>
    %6 = arith.addf %3, %5 : vector<16x32xf32>
    %c0_6 = arith.constant 0 : index
    %c0_7 = arith.constant 0 : index
    %7 = vector.load %arg5[%c0_6, %c0_7] : memref<32x32xf32, #tpu.memory_space<vmem>>, vector<32x32xf32>
    %cst_8 = arith.constant dense<0.000000e+00> : vector<16x32xf32>
    %8 = tpu.matmul %1, %7, %cst_8 {dimension_numbers = #tpu.dot_dimension_numbers<[1], [0], [0], [1], [0, 0, 1, 1], [], []>} : vector<16x32xf32>, vector<32x32xf32>, vector<16x32xf32> -> vector<16x32xf32>
    %c0_9 = arith.constant 0 : index
    %c0_10 = arith.constant 0 : index
    %9 = vector.load %arg6[%c0_9, %c0_10] : memref<1x32xf32, #tpu.memory_space<vmem>>, vector<1x32xf32>
    %10 = vector.broadcast %9 : vector<1x32xf32> to vector<16x32xf32>
    %11 = arith.addf %8, %10 : vector<16x32xf32>
    %c0_11 = arith.constant 0 : index
    %c0_12 = arith.constant 0 : index
    %c0_13 = arith.constant 0 : index
    %12 = vector.load %arg7[%c0_11, %c0_12, %c0_13] : memref<1x16x32xf32, #tpu.memory_space<vmem>>, vector<1x16x32xf32>
    %13 = vector.shape_cast %12 : vector<1x16x32xf32> to vector<16x32xf32>
    %14 = vector.shape_cast %6 : vector<16x32xf32> to vector<1x16x32xf32>
    tpu.vector_store %arg7[%c0_11, %c0_12, %c0_13], %14 {strides = array<i32>} : memref<1x16x32xf32, #tpu.memory_space<vmem>>, vector<1x16x32xf32>,
    %c0_14 = arith.constant 0 : index
    %c0_15 = arith.constant 0 : index
    %c0_16 = arith.constant 0 : index
    %15 = vector.load %arg8[%c0_14, %c0_15, %c0_16] : memref<1x16x32xf32, #tpu.memory_space<vmem>>, vector<1x16x32xf32>
    %16 = vector.shape_cast %15 : vector<1x16x32xf32> to vector<16x32xf32>
    %17 = vector.shape_cast %11 : vector<16x32xf32> to vector<1x16x32xf32>
    tpu.vector_store %arg8[%c0_14, %c0_15, %c0_16], %17 {strides = array<i32>} : memref<1x16x32xf32, #tpu.memory_space<vmem>>, vector<1x16x32xf32>,
    return
  }
  func.func @transform_0(%arg0: i32, %arg1: i32) -> (i32, i32, i32) {
    %c0_i32 = arith.constant 0 : i32
    %c0_i32_0 = arith.constant 0 : i32
    return %arg0, %arg1, %c0_i32 : i32, i32, i32
  }
  func.func @transform_1(%arg0: i32, %arg1: i32) -> (i32, i32) {
    %c0_i32 = arith.constant 0 : i32
    %c0_i32_0 = arith.constant 0 : i32
    %c0_i32_1 = arith.constant 0 : i32
    return %c0_i32, %c0_i32_0 : i32, i32
  }
  func.func @transform_2(%arg0: i32, %arg1: i32) -> (i32, i32) {
    %c0_i32 = arith.constant 0 : i32
    %c0_i32_0 = arith.constant 0 : i32
    %c0_i32_1 = arith.constant 0 : i32
    return %c0_i32, %c0_i32_0 : i32, i32
  }
  func.func @transform_3(%arg0: i32, %arg1: i32) -> (i32, i32) {
    %c0_i32 = arith.constant 0 : i32
    %c0_i32_0 = arith.constant 0 : i32
    %c0_i32_1 = arith.constant 0 : i32
    return %c0_i32, %c0_i32_0 : i32, i32
  }
  func.func @transform_4(%arg0: i32, %arg1: i32) -> (i32, i32) {
    %c0_i32 = arith.constant 0 : i32
    %c0_i32_0 = arith.constant 0 : i32
    %c0_i32_1 = arith.constant 0 : i32
    return %c0_i32, %c0_i32_0 : i32, i32
  }
  func.func @transform_5(%arg0: i32, %arg1: i32) -> (i32, i32, i32) {
    %c0_i32 = arith.constant 0 : i32
    %c0_i32_0 = arith.constant 0 : i32
    return %arg0, %arg1, %c0_i32 : i32, i32, i32
  }
  func.func @transform_6(%arg0: i32, %arg1: i32) -> (i32, i32, i32) {
    %c0_i32 = arith.constant 0 : i32
    %c0_i32_0 = arith.constant 0 : i32
    return %arg0, %arg1, %c0_i32 : i32, i32, i32
  }
}

</mosaic_0001>

<llo_original>
// kernel: tpu_custom_call.1
$region0: #{tpu_custom_call.1}
  #allocation0 [shape = 'u32[]', space=smem, size = 0x4, offset = 0x4, fixed_abs, tag = 'smem constant byte address 0x4 - core index']
  #allocation1 [shape = 'u32[144,128]{1,0:T(1,128)}', space=vmem, size = 0x12000, scoped, tag = 'internal scratch']
  %s0 = inlined_call_operand.hbm [shape: f32[2,32,32], index: 0, kind: input, shape index: {}]
  %s1 = inlined_call_operand.hbm [shape: f32[32,32], index: 1, kind: input, shape index: {}]
  %s2 = inlined_call_operand.hbm [shape: f32[1,32], index: 2, kind: input, shape index: {}]
  %s3 = inlined_call_operand.hbm [shape: f32[32,32], index: 3, kind: input, shape index: {}]
  %s4 = inlined_call_operand.hbm [shape: f32[1,32], index: 4, kind: input, shape index: {}]
  %s5 = inlined_call_operand.hbm [shape: f32[2,32,32], index: 5, kind: output, shape index: {0}]
  %s6 = inlined_call_operand.hbm [shape: f32[2,32,32], index: 6, kind: output, shape index: {1}]
  %7 = xla_tuple %s5, %s6
  %s8 = sld [smem:[#allocation0]]
  $region81: #{tpu_custom_call.1} parent=0
    _
  %s10 = ssub.s32 1, %s8
  %s11 = scalar_select 0, %s10, %s8
  $region1: #{tpu_custom_call.1} parent=0
    #allocation2 [shape = 'u8[16384]{0}', space=vmem, size = 0x4000, scoped, tag = 'input window, operand 0']
    #allocation3 [shape = 's32[2]{0}', space=sflag, size = 0x8, scoped, tag = 'scoped memory for tpu_custom_call.1']
    #allocation4 [shape = 's32[2]{0}', space=sflag, size = 0x8, scoped, tag = 'scoped memory for tpu_custom_call.1']
    #allocation5 [shape = 'u8[16384]{0}', space=vmem, size = 0x4000, scoped, tag = 'input window, operand 1, single buffered']
    #allocation6 [shape = 's32[1]{0}', space=sflag, size = 0x4, scoped, tag = 'scoped memory for tpu_custom_call.1']
    #allocation7 [shape = 'u8[512]{0}', space=vmem, size = 0x400, scoped, tag = 'input window, operand 2, single buffered']
    #allocation8 [shape = 'u8[16384]{0}', space=vmem, size = 0x4000, scoped, tag = 'input window, operand 3, single buffered']
    #allocation9 [shape = 's32[1]{0}', space=sflag, size = 0x4, scoped, tag = 'scoped memory for tpu_custom_call.1']
    #allocation10 [shape = 'u8[512]{0}', space=vmem, size = 0x400, scoped, tag = 'input window, operand 4, single buffered']
    #allocation11 [shape = 'u8[16384]{0}', space=vmem, size = 0x4000, scoped, tag = 'output window, operand 0']
    #allocation12 [shape = 'u8[16384]{0}', space=vmem, size = 0x4000, scoped, tag = 'output window, operand 1']
    #allocation13 [shape = 's32[2]{0}', space=sflag, size = 0x8, scoped, tag = 'scoped memory for tpu_custom_call.1']
    %12 = vsyncpa [#allocation3], 0
    %s13 = scalar_lea.sflag [#allocation3], 1
    %14 = vsyncpa %s13, 0
    %15 = vsyncpa [#allocation6], 0
    %16 = vsyncpa [#allocation9], 0
    %17 = vsyncpa [#allocation4], 0
    %s18 = scalar_lea.sflag [#allocation4], 1
    %19 = vsyncpa %s18, 0
    %20 = vsyncpa [#allocation13], 0
    %s21 = scalar_lea.sflag [#allocation13], 1
    %22 = vsyncpa %s21, 0
    loop: start=0, step=1, limit=6
    $region2: #{tpu_custom_call.1} parent=1 // loop_pre_header
      _
    $region3: #{tpu_custom_call.1} parent=1 // loop_header
      %s24 = sphi 0, %s28
      %p25 = scmp.ge.s32.totalorder %s24, 6
      %s31 = sphi 0, %s43
      %s32 = sphi 0, %s39
      %s33 = sphi 0, %s31
      %s34 = sphi 0, %s32
      %s35 = sphi 0, %s33
      %s36 = sphi 0, %s34
      %s48 = sphi 0, %s50
      %s51 = sphi 0, %s48
      %s52 = sphi 0, %s51
      %s68 = sphi 0, %s52
      %s72 = sphi 0, %s72
      %s74 = sphi 0, %s72
      %s75 = sphi 0, %s74
      %s89 = sphi 0, %s75
      %s93 = sphi 0, %s93
      %s95 = sphi 0, %s93
      %s96 = sphi 0, %s95
      %s110 = sphi 0, %s96
      %s114 = sphi 0, %s114
      %s116 = sphi 0, %s114
      %s117 = sphi 0, %s116
      %s131 = sphi 0, %s117
      %s135 = sphi 0, %s135
      %s137 = sphi 0, %s135
      %s138 = sphi 0, %s137
      %s152 = sphi 0, %s138
      %s160 = sphi 0, %s162
      %s163 = sphi 0, %s160
      %s164 = sphi 0, %s163
      %s180 = sphi 0, %s164
      %s188 = sphi 0, %s190
      %s191 = sphi 0, %s188
      %s192 = sphi 0, %s191
      %s208 = sphi 0, %s192
    $region4: #{tpu_custom_call.1} parent=1 // loop_header_branch
      %27 = sbr.rel (%p25) target = $region8
    $region5: #{tpu_custom_call.1} parent=1 // loop_body
      %s29 = ssub.s32 %s24, 1
      %s30 = ssub.s32 %s24, 2
      %s37 = sadd.s32 1, %s32
      %p38 = scmp.ge.s32.totalorder %s37, 2
      %s39 = scalar_select %p38, 0, %s37
      %s40 = sadd.s32 1, %s31
      %s41 = scalar_select %p38, %s40, %s31
      %p42 = scmp.ge.s32.totalorder %s41, 2
      %s43 = scalar_select %p42, 0, %s41
      %s44 = ssub.s32 %s31, %s43
      %s45 = ssub.s32 %s32, %s39
      %s46 = sor.u32 %s44, %s45
      %p47 = scmp.eq.s32.totalorder %s46, 0
      %s49 = sadd.s32 %s48, 1
      %s50 = scalar_select %p47, %s48, %s49
      %p53 = pneg %p47
      %p54 = scmp.eq.s32.totalorder %s24, 3
      %p55 = por %p53, %p54
      %p56 = scmp.ne.s32.totalorder %s48, %s51
      %p57 = scmp.eq.s32.totalorder %s24, 0
      %p58 = por %p56, %p57
      %p59 = scmp.ne.s32.totalorder %s48, %s51
      %p60 = scmp.eq.s32.totalorder %s29, 3
      %p61 = por %p59, %p60
      %p62 = scmp.ne.s32.totalorder %s51, %s52
      %p63 = scmp.eq.s32.totalorder %s29, 0
      %p64 = por %p62, %p63
      %p65 = scmp.ne.s32.totalorder %s51, %s52
      %p66 = scmp.eq.s32.totalorder %s30, 3
      %p67 = por %p65, %p66
      %p69 = scmp.ne.s32.totalorder %s52, %s68
      %p70 = scmp.eq.s32.totalorder %s30, 0
      %p71 = por %p69, %p70
      %s73 = sadd.s32 %s72, 1
      %p76 = scmp.eq.s32.totalorder %s24, 3
      %p77 = scmp.ne.s32.totalorder %s72, %s74
      %p78 = scmp.eq.s32.totalorder %s24, 0
      %p79 = por %p77, %p78
      %p80 = scmp.ne.s32.totalorder %s72, %s74
      %p81 = scmp.eq.s32.totalorder %s29, 3
      %p82 = por %p80, %p81
      %p83 = scmp.ne.s32.totalorder %s74, %s75
      %p84 = scmp.eq.s32.totalorder %s29, 0
      %p85 = por %p83, %p84
      %p86 = scmp.ne.s32.totalorder %s74, %s75
      %p87 = scmp.eq.s32.totalorder %s30, 3
      %p88 = por %p86, %p87
      %p90 = scmp.ne.s32.totalorder %s75, %s89
      %p91 = scmp.eq.s32.totalorder %s30, 0
      %p92 = por %p90, %p91
      %s94 = sadd.s32 %s93, 1
      %p97 = scmp.eq.s32.totalorder %s24, 3
      %p98 = scmp.ne.s32.totalorder %s93, %s95
      %p99 = scmp.eq.s32.totalorder %s24, 0
      %p100 = por %p98, %p99
      %p101 = scmp.ne.s32.totalorder %s93, %s95
      %p102 = scmp.eq.s32.totalorder %s29, 3
      %p103 = por %p101, %p102
      %p104 = scmp.ne.s32.totalorder %s95, %s96
      %p105 = scmp.eq.s32.totalorder %s29, 0
      %p106 = por %p104, %p105
      %p107 = scmp.ne.s32.totalorder %s95, %s96
      %p108 = scmp.eq.s32.totalorder %s30, 3
      %p109 = por %p107, %p108
      %p111 = scmp.ne.s32.totalorder %s96, %s110
      %p112 = scmp.eq.s32.totalorder %s30, 0
      %p113 = por %p111, %p112
      %s115 = sadd.s32 %s114, 1
      %p118 = scmp.eq.s32.totalorder %s24, 3
      %p119 = scmp.ne.s32.totalorder %s114, %s116
      %p120 = scmp.eq.s32.totalorder %s24, 0
      %p121 = por %p119, %p120
      %p122 = scmp.ne.s32.totalorder %s114, %s116
      %p123 = scmp.eq.s32.totalorder %s29, 3
      %p124 = por %p122, %p123
      %p125 = scmp.ne.s32.totalorder %s116, %s117
      %p126 = scmp.eq.s32.totalorder %s29, 0
      %p127 = por %p125, %p126
      %p128 = scmp.ne.s32.totalorder %s116, %s117
      %p129 = scmp.eq.s32.totalorder %s30, 3
      %p130 = por %p128, %p129
      %p132 = scmp.ne.s32.totalorder %s117, %s131
      %p133 = scmp.eq.s32.totalorder %s30, 0
      %p134 = por %p132, %p133
      %s136 = sadd.s32 %s135, 1
      %p139 = scmp.eq.s32.totalorder %s24, 3
      %p140 = scmp.ne.s32.totalorder %s135, %s137
      %p141 = scmp.eq.s32.totalorder %s24, 0
      %p142 = por %p140, %p141
      %p143 = scmp.ne.s32.totalorder %s135, %s137
      %p144 = scmp.eq.s32.totalorder %s29, 3
      %p145 = por %p143, %p144
      %p146 = scmp.ne.s32.totalorder %s137, %s138
      %p147 = scmp.eq.s32.totalorder %s29, 0
      %p148 = por %p146, %p147
      %p149 = scmp.ne.s32.totalorder %s137, %s138
      %p150 = scmp.eq.s32.totalorder %s30, 3
      %p151 = por %p149, %p150
      %p153 = scmp.ne.s32.totalorder %s138, %s152
      %p154 = scmp.eq.s32.totalorder %s30, 0
      %p155 = por %p153, %p154
      %s156 = ssub.s32 %s31, %s43
      %s157 = ssub.s32 %s32, %s39
      %s158 = sor.u32 %s156, %s157
      %p159 = scmp.eq.s32.totalorder %s158, 0
      %s161 = sadd.s32 %s160, 1
      %s162 = scalar_select %p159, %s160, %s161
      %p165 = pneg %p159
      %p166 = scmp.eq.s32.totalorder %s24, 3
      %p167 = por %p165, %p166
      %p168 = scmp.ne.s32.totalorder %s160, %s163
      %p169 = scmp.eq.s32.totalorder %s24, 0
      %p170 = por %p168, %p169
      %p171 = scmp.ne.s32.totalorder %s160, %s163
      %p172 = scmp.eq.s32.totalorder %s29, 3
      %p173 = por %p171, %p172
      %p174 = scmp.ne.s32.totalorder %s163, %s164
      %p175 = scmp.eq.s32.totalorder %s29, 0
      %p176 = por %p174, %p175
      %p177 = scmp.ne.s32.totalorder %s163, %s164
      %p178 = scmp.eq.s32.totalorder %s30, 3
      %p179 = por %p177, %p178
      %p181 = scmp.ne.s32.totalorder %s164, %s180
      %p182 = scmp.eq.s32.totalorder %s30, 0
      %p183 = por %p181, %p182
      %s184 = ssub.s32 %s31, %s43
      %s185 = ssub.s32 %s32, %s39
      %s186 = sor.u32 %s184, %s185
      %p187 = scmp.eq.s32.totalorder %s186, 0
      %s189 = sadd.s32 %s188, 1
      %s190 = scalar_select %p187, %s188, %s189
      %p193 = pneg %p187
      %p194 = scmp.eq.s32.totalorder %s24, 3
      %p195 = por %p193, %p194
      %p196 = scmp.ne.s32.totalorder %s188, %s191
      %p197 = scmp.eq.s32.totalorder %s24, 0
      %p198 = por %p196, %p197
      %p199 = scmp.ne.s32.totalorder %s188, %s191
      %p200 = scmp.eq.s32.totalorder %s29, 3
      %p201 = por %p199, %p200
      %p202 = scmp.ne.s32.totalorder %s191, %s192
      %p203 = scmp.eq.s32.totalorder %s29, 0
      %p204 = por %p202, %p203
      %p205 = scmp.ne.s32.totalorder %s191, %s192
      %p206 = scmp.eq.s32.totalorder %s30, 3
      %p207 = por %p205, %p206
      %p209 = scmp.ne.s32.totalorder %s192, %s208
      %p210 = scmp.eq.s32.totalorder %s30, 0
      %p211 = por %p209, %p210
      %p212 = scmp.le.s32.totalorder 1, %s24
      %p213 = scmp.lt.s32.totalorder %s24, 5
      %p214 = pnand %p212, %p213
      %p215 = pneg %p214
      // Predicated region
      $region9: #{tpu_custom_call.1} parent=5 // pred_check
        _
      $region10: #{tpu_custom_call.1} parent=5 // pred_check_branch
        %217 = sbr.rel (%p214) target = $region12
      $region11: #{tpu_custom_call.1} parent=5 // pred_region
        %s218 = ssub.s32 %s24, 1
        // Predicated region
        $region13: #{tpu_custom_call.1} parent=11 // pred_check
          %p219 = pneg %p85
        $region14: #{tpu_custom_call.1} parent=11 // pred_check_branch
          %221 = sbr.rel (%p219) target = $region16
        $region15: #{tpu_custom_call.1} parent=11 // pred_region
          %s223 = ssub.s32 512, 512
          %224 = vsyncadd [#allocation6], %s223
          %s225 = sshll.u32 [#allocation5], 4
          %s226 = int_to_ptr.vmem [resolvable:$true] %s225
          %231 = dma.hbm_to_vmem [thread:$0]  %s1, 512, %s226, [#allocation6], 128, 128, 8
        $region16: #{tpu_custom_call.1} parent=11 // pred_fallthru
          _
        // Predicated region
        $region17: #{tpu_custom_call.1} parent=11 // pred_check
          %p232 = pneg %p106
        $region18: #{tpu_custom_call.1} parent=11 // pred_check_branch
          %234 = sbr.rel (%p232) target = $region20
        $region19: #{tpu_custom_call.1} parent=11 // pred_region
          %s236 = ssub.s32 16, 16
          %237 = vsyncadd [#allocation6], %s236
          %s239 = sshll.u32 [#allocation7], 4
          %s240 = int_to_ptr.vmem [resolvable:$true] %s239
          %242 = dma.hbm_to_vmem [thread:$0]  %s2, 16, %s240, [#allocation6]
        $region20: #{tpu_custom_call.1} parent=11 // pred_fallthru
          _
        // Predicated region
        $region21: #{tpu_custom_call.1} parent=11 // pred_check
          %p243 = pneg %p127
        $region22: #{tpu_custom_call.1} parent=11 // pred_check_branch
          %245 = sbr.rel (%p243) target = $region24
        $region23: #{tpu_custom_call.1} parent=11 // pred_region
          %s247 = ssub.s32 512, 512
          %248 = vsyncadd [#allocation9], %s247
          %s249 = sshll.u32 [#allocation8], 4
          %s250 = int_to_ptr.vmem [resolvable:$true] %s249
          %255 = dma.hbm_to_vmem [thread:$0]  %s3, 512, %s250, [#allocation9], 128, 128, 8
        $region24: #{tpu_custom_call.1} parent=11 // pred_fallthru
          _
        // Predicated region
        $region25: #{tpu_custom_call.1} parent=11 // pred_check
          %p256 = pneg %p148
        $region26: #{tpu_custom_call.1} parent=11 // pred_check_branch
          %258 = sbr.rel (%p256) target = $region28
        $region27: #{tpu_custom_call.1} parent=11 // pred_region
          %s260 = ssub.s32 16, 16
          %261 = vsyncadd [#allocation9], %s260
          %s263 = sshll.u32 [#allocation10], 4
          %s264 = int_to_ptr.vmem [resolvable:$true] %s263
          %266 = dma.hbm_to_vmem [thread:$0]  %s4, 16, %s264, [#allocation9]
        $region28: #{tpu_custom_call.1} parent=11 // pred_fallthru
          _
      $region12: #{tpu_custom_call.1} parent=5 // pred_fallthru
        _
      %p267 = scmp.lt.s32.totalorder %s24, 4
      // Predicated region
      $region29: #{tpu_custom_call.1} parent=5 // pred_check
        %p268 = pneg %p267
      $region30: #{tpu_custom_call.1} parent=5 // pred_check_branch
        %270 = sbr.rel (%p268) target = $region32
      $region31: #{tpu_custom_call.1} parent=5 // pred_region
        // Predicated region
        $region33: #{tpu_custom_call.1} parent=31 // pred_check
          %p271 = pneg %p58
        $region34: #{tpu_custom_call.1} parent=31 // pred_check_branch
          %273 = sbr.rel (%p271) target = $region36
        $region35: #{tpu_custom_call.1} parent=31 // pred_region
          %s274 = sand.u32 %s48, 1
          %s275 = scalar_lea.sflag [#allocation3], %s274
          %s276 = sand.u32 %s48, 1
          %s277 = smul.addr %s276, 16
          %s278 = scalar_lea.vmem [#allocation2], %s277
          %s279 = smul.u32 2, %s32
          %s281 = ssub.s32 256, 256
          %282 = vsyncadd %s275, %s281
          %s283 = smul.addr %s31, 4
          %s284 = sadd.s32 %s279, %s283
          %s285 = smul.addr %s284, 128
          %s286 = scalar_lea.hbm %s0, %s285
          %s287 = sshll.u32 %s278, 4
          %s288 = int_to_ptr.vmem [resolvable:$true] %s287
          %293 = dma.hbm_to_vmem [thread:$0]  %s286, 256, %s288, %s275, 128, 128, 8
        $region36: #{tpu_custom_call.1} parent=31 // pred_fallthru
          _
      $region32: #{tpu_custom_call.1} parent=5 // pred_fallthru
        _
      %p294 = scmp.le.s32.totalorder 1, %s24
      %p295 = scmp.lt.s32.totalorder %s24, 5
      %p296 = pnand %p294, %p295
      %p297 = pneg %p296
      // Predicated region
      $region37: #{tpu_custom_call.1} parent=5 // pred_check
        _
      $region38: #{tpu_custom_call.1} parent=5 // pred_check_branch
        %299 = sbr.rel (%p296) target = $region40
      $region39: #{tpu_custom_call.1} parent=5 // pred_region
        %s300 = ssub.s32 %s24, 1
        %s301 = sand.u32 %s51, 1
        %s302 = scalar_lea.sflag [#allocation3], %s301
        %s303 = sand.u32 %s51, 1
        %s304 = smul.addr %s303, 16
        %s305 = scalar_lea.vmem [#allocation2], %s304
        // Predicated region
        $region41: #{tpu_custom_call.1} parent=39 // pred_check
          %p306 = pneg %p64
        $region42: #{tpu_custom_call.1} parent=39 // pred_check_branch
          %308 = sbr.rel (%p306) target = $region44
        $region43: #{tpu_custom_call.1} parent=39 // pred_region
          %309 = dma.done %s302, 256
        $region44: #{tpu_custom_call.1} parent=39 // pred_fallthru
          _
        // Predicated region
        $region45: #{tpu_custom_call.1} parent=39 // pred_check
          %p310 = pneg %p85
        $region46: #{tpu_custom_call.1} parent=39 // pred_check_branch
          %312 = sbr.rel (%p310) target = $region48
        $region47: #{tpu_custom_call.1} parent=39 // pred_region
          %313 = dma.done [#allocation6], 512
        $region48: #{tpu_custom_call.1} parent=39 // pred_fallthru
          _
        // Predicated region
        $region49: #{tpu_custom_call.1} parent=39 // pred_check
          %p314 = pneg %p106
        $region50: #{tpu_custom_call.1} parent=39 // pred_check_branch
          %316 = sbr.rel (%p314) target = $region52
        $region51: #{tpu_custom_call.1} parent=39 // pred_region
          %317 = dma.done [#allocation6], 16
        $region52: #{tpu_custom_call.1} parent=39 // pred_fallthru
          _
        // Predicated region
        $region53: #{tpu_custom_call.1} parent=39 // pred_check
          %p318 = pneg %p127
        $region54: #{tpu_custom_call.1} parent=39 // pred_check_branch
          %320 = sbr.rel (%p318) target = $region56
        $region55: #{tpu_custom_call.1} parent=39 // pred_region
          %321 = dma.done [#allocation9], 512
        $region56: #{tpu_custom_call.1} parent=39 // pred_fallthru
          _
        // Predicated region
        $region57: #{tpu_custom_call.1} parent=39 // pred_check
          %p322 = pneg %p148
        $region58: #{tpu_custom_call.1} parent=39 // pred_check_branch
          %324 = sbr.rel (%p322) target = $region60
        $region59: #{tpu_custom_call.1} parent=39 // pred_region
          %325 = dma.done [#allocation9], 16
        $region60: #{tpu_custom_call.1} parent=39 // pred_fallthru
          _
        %s326 = sand.u32 %s51, 1
        %s327 = scalar_lea.sflag [#allocation3], %s326
        %s328 = sand.u32 %s51, 1
        %s329 = smul.addr %s328, 16
        %s330 = scalar_lea.vmem [#allocation2], %s329
        %p331 = pneg %p64
        %p332 = pneg %p61
        %p333 = pneg %p85
        %p334 = pneg %p82
        %p335 = pneg %p106
        %p336 = pneg %p103
        %p337 = pneg %p127
        %p338 = pneg %p124
        %p339 = pneg %p148
        %p340 = pneg %p145
        %p341 = pneg %p176
        %p342 = pneg %p173
        %s343 = sand.u32 %s163, 1
        %s344 = scalar_lea.sflag [#allocation4], %s343
        %s345 = sand.u32 %s163, 1
        %s346 = smul.addr %s345, 16
        %s347 = scalar_lea.vmem [#allocation11], %s346
        %p348 = pneg %p204
        %p349 = pneg %p201
        %s350 = sand.u32 %s191, 1
        %s351 = scalar_lea.sflag [#allocation13], %s350
        %s352 = sand.u32 %s191, 1
        %s353 = smul.addr %s352, 16
        %s354 = scalar_lea.vmem [#allocation12], %s353
        %s355 = smul.u32 2, %s34
        %s356 = smul.u32 2, %s34
        %s357 = smul.u32 2, %s34
        %v358 = vld [vmem:[%s305] sm:$0xff]
        %v359 = vld [vmem:[%s305 + $0x8] sm:$0xff]
        %v360 = vld [vmem:[#allocation5] sm:$0xff]
        %v361 = vld [vmem:[#allocation5 + $0x8] sm:$0xff]
        %v362 = vld [vmem:[#allocation5 + $0x10] sm:$0xff]
        %v363 = vld [vmem:[#allocation5 + $0x18] sm:$0xff]
        %v364 = vld [vmem:[#allocation7] sm:$0x1]
        %v366 = vlaneseq
        %v367 = vshrl.u32 %v366, 7
        %v368 = vsub.s32 0, %v367
        %v369 = vrot.slane %v364, %v368
        %vm371 = vcmask 261120
        %v373 = vsel %vm371, %v358, 0
        %v376 = vsel %vm371, %v359, 0
        %378 = vmatprep.subr.mxu0 0.0
        %379 = vmatpush1.msra.mxu0 %v360
        %380 = vmatprep.subr.mxu0 0.0
        %381 = vmatpush1.msra.mxu0 %v361
        %382 = vmatprep.subr.mxu0 0.0
        %383 = vmatpush1.msra.mxu0 %v362
        %384 = vmatprep.subr.mxu0 0.0
        %385 = vmatpush1.msra.mxu0 %v363
        %386 = vmatprep.subr.mxu0 0.0
        %387 = vmatpush1.msra.mxu0 0.0
        %388 = vmatprep.subr.mxu0 0.0
        %389 = vmatpush1.msra.mxu0 0.0
        %390 = vmatprep.subr.mxu0 0.0
        %391 = vmatpush1.msra.mxu0 0.0
        %392 = vmatprep.subr.mxu0 0.0
        %393 = vmatpush1.msra.mxu0 0.0
        %394 = vmatprep.subr.mxu0 0.0
        %395 = vmatpush1.msra.mxu0 0.0
        %396 = vmatprep.subr.mxu0 0.0
        %397 = vmatpush1.msra.mxu0 0.0
        %398 = vmatprep.subr.mxu0 0.0
        %399 = vmatpush1.msra.mxu0 0.0
        %400 = vmatprep.subr.mxu0 0.0
        %401 = vmatpush1.msra.mxu0 0.0
        %402 = vmatprep.subr.mxu0 0.0
        %403 = vmatpush1.msra.mxu0 0.0
        %404 = vmatprep.subr.mxu0 0.0
        %405 = vmatpush1.msra.mxu0 0.0
        %406 = vmatprep.subr.mxu0 0.0
        %407 = vmatpush1.msra.mxu0 0.0
        %408 = vmatprep.subr.mxu0 0.0
        %409 = vmatpush1.msra.mxu0 0.0
        %410 = vmatprep.subr.mxu0 0.0
        %411 = vmatpush1.msra.mxu0 0.0
        %412 = vmatprep.subr.mxu0 0.0
        %413 = vmatpush1.msra.mxu0 0.0
        %414 = vmatprep.subr.mxu0 0.0
        %415 = vmatpush1.msra.mxu0 0.0
        %416 = vmatprep.subr.mxu0 0.0
        %417 = vmatpush1.msra.mxu0 0.0
        %418 = vmatprep.subr.mxu0 0.0
        %419 = vmatpush1.msra.mxu0 0.0
        %420 = vmatprep.subr.mxu0 0.0
        %421 = vmatpush1.msra.mxu0 0.0
        %422 = vmatprep.subr.mxu0 0.0
        %423 = vmatpush1.msra.mxu0 0.0
        %424 = vmatprep.subr.mxu0 0.0
        %425 = vmatpush1.msra.mxu0 0.0
        %426 = vmatprep.subr.mxu0 0.0
        %427 = vmatpush1.msra.mxu0 0.0
        %428 = vmatprep.subr.mxu0 0.0
        %429 = vmatpush1.msra.mxu0 0.0
        %430 = vmatprep.subr.mxu0 0.0
        %431 = vmatpush1.msra.mxu0 0.0
        %432 = vmatprep.subr.mxu0 0.0
        %433 = vmatpush1.msra.mxu0 0.0
        %434 = vmatprep.subr.mxu0 0.0
        %435 = vmatpush1.msra.mxu0 0.0
        %436 = vmatprep.subr.mxu0 0.0
        %437 = vmatpush1.msra.mxu0 0.0
        %438 = vmatprep.subr.mxu0 0.0
        %439 = vmatpush1.msra.mxu0 0.0
        %440 = vmatprep.subr.mxu0 0.0
        %441 = vmatpush1.msra.mxu0 0.0
        %442 = vmatprep.mubr.f32.mxu0 0.0
        %443 = vmatmul.mubr.f32.gmra.mrb[0].mxu0 %v373
        %v444 = vpop.f32.mrb[0].mxu0
        %v445 = vadd.f32 %v369, %v444
        %v446 = vpop.f32.mrb[0].mxu0
        %447 = vmatprep.mubr.f32.mxu0 0.0
        %448 = vmatmul.mubr.f32.gmra.mrb[0].mxu0 %v376
        %v449 = vpop.f32.mrb[0].mxu0
        %v450 = vadd.f32 %v369, %v449
        %v451 = vpop.f32.mrb[0].mxu0
        %452 = vdwg.mxu0
        %v453 = vld [vmem:[#allocation8] sm:$0xff]
        %v454 = vld [vmem:[#allocation8 + $0x8] sm:$0xff]
        %v455 = vld [vmem:[#allocation8 + $0x10] sm:$0xff]
        %v456 = vld [vmem:[#allocation8 + $0x18] sm:$0xff]
        %v457 = vld [vmem:[#allocation10] sm:$0x1]
        %v459 = vlaneseq
        %v460 = vshrl.u32 %v459, 7
        %v461 = vsub.s32 0, %v460
        %v462 = vrot.slane %v457, %v461
        %464 = vmatprep.subr.mxu0 0.0
        %465 = vmatpush1.msra.mxu0 %v453
        %466 = vmatprep.subr.mxu0 0.0
        %467 = vmatpush1.msra.mxu0 %v454
        %468 = vmatprep.subr.mxu0 0.0
        %469 = vmatpush1.msra.mxu0 %v455
        %470 = vmatprep.subr.mxu0 0.0
        %471 = vmatpush1.msra.mxu0 %v456
        %472 = vmatprep.subr.mxu0 0.0
        %473 = vmatpush1.msra.mxu0 0.0
        %474 = vmatprep.subr.mxu0 0.0
        %475 = vmatpush1.msra.mxu0 0.0
        %476 = vmatprep.subr.mxu0 0.0
        %477 = vmatpush1.msra.mxu0 0.0
        %478 = vmatprep.subr.mxu0 0.0
        %479 = vmatpush1.msra.mxu0 0.0
        %480 = vmatprep.subr.mxu0 0.0
        %481 = vmatpush1.msra.mxu0 0.0
        %482 = vmatprep.subr.mxu0 0.0
        %483 = vmatpush1.msra.mxu0 0.0
        %484 = vmatprep.subr.mxu0 0.0
        %485 = vmatpush1.msra.mxu0 0.0
        %486 = vmatprep.subr.mxu0 0.0
        %487 = vmatpush1.msra.mxu0 0.0
        %488 = vmatprep.subr.mxu0 0.0
        %489 = vmatpush1.msra.mxu0 0.0
        %490 = vmatprep.subr.mxu0 0.0
        %491 = vmatpush1.msra.mxu0 0.0
        %492 = vmatprep.subr.mxu0 0.0
        %493 = vmatpush1.msra.mxu0 0.0
        %494 = vmatprep.subr.mxu0 0.0
        %495 = vmatpush1.msra.mxu0 0.0
        %496 = vmatprep.subr.mxu0 0.0
        %497 = vmatpush1.msra.mxu0 0.0
        %498 = vmatprep.subr.mxu0 0.0
        %499 = vmatpush1.msra.mxu0 0.0
        %500 = vmatprep.subr.mxu0 0.0
        %501 = vmatpush1.msra.mxu0 0.0
        %502 = vmatprep.subr.mxu0 0.0
        %503 = vmatpush1.msra.mxu0 0.0
        %504 = vmatprep.subr.mxu0 0.0
        %505 = vmatpush1.msra.mxu0 0.0
        %506 = vmatprep.subr.mxu0 0.0
        %507 = vmatpush1.msra.mxu0 0.0
        %508 = vmatprep.subr.mxu0 0.0
        %509 = vmatpush1.msra.mxu0 0.0
        %510 = vmatprep.subr.mxu0 0.0
        %511 = vmatpush1.msra.mxu0 0.0
        %512 = vmatprep.subr.mxu0 0.0
        %513 = vmatpush1.msra.mxu0 0.0
        %514 = vmatprep.subr.mxu0 0.0
        %515 = vmatpush1.msra.mxu0 0.0
        %516 = vmatprep.subr.mxu0 0.0
        %517 = vmatpush1.msra.mxu0 0.0
        %518 = vmatprep.subr.mxu0 0.0
        %519 = vmatpush1.msra.mxu0 0.0
        %520 = vmatprep.subr.mxu0 0.0
        %521 = vmatpush1.msra.mxu0 0.0
        %522 = vmatprep.subr.mxu0 0.0
        %523 = vmatpush1.msra.mxu0 0.0
        %524 = vmatprep.subr.mxu0 0.0
        %525 = vmatpush1.msra.mxu0 0.0
        %526 = vmatprep.subr.mxu0 0.0
        %527 = vmatpush1.msra.mxu0 0.0
        %528 = vmatprep.mubr.f32.mxu0 0.0
        %529 = vmatmul.mubr.f32.gmra.mrb[0].mxu0 %v373
        %v530 = vpop.f32.mrb[0].mxu0
        %v531 = vadd.f32 %v462, %v530
        %v532 = vpop.f32.mrb[0].mxu0
        %533 = vmatprep.mubr.f32.mxu0 0.0
        %534 = vmatmul.mubr.f32.gmra.mrb[0].mxu0 %v376
        %v535 = vpop.f32.mrb[0].mxu0
        %v536 = vadd.f32 %v462, %v535
        %v537 = vpop.f32.mrb[0].mxu0
        %538 = vdwg.mxu0
        %539 = vst.msk [vmem:[%s347] sm:$0xff] %vm371, %v445
        %540 = vst.msk [vmem:[%s347 + $0x8] sm:$0xff] %vm371, %v450
        %541 = vst.msk [vmem:[%s354] sm:$0xff] %vm371, %v531
        %542 = vst.msk [vmem:[%s354 + $0x8] sm:$0xff] %vm371, %v536
        %s543 = sand.u32 %s163, 1
        %s544 = scalar_lea.sflag [#allocation4], %s543
        %s545 = sand.u32 %s163, 1
        %s546 = smul.addr %s545, 16
        %s547 = scalar_lea.vmem [#allocation11], %s546
        %s548 = sand.u32 %s191, 1
        %s549 = scalar_lea.sflag [#allocation13], %s548
        %s550 = sand.u32 %s191, 1
        %s551 = smul.addr %s550, 16
        %s552 = scalar_lea.vmem [#allocation12], %s551
        // Predicated region
        $region61: #{tpu_custom_call.1} parent=39 // pred_check
          %p553 = pneg %p173
        $region62: #{tpu_custom_call.1} parent=39 // pred_check_branch
          %555 = sbr.rel (%p553) target = $region64
        $region63: #{tpu_custom_call.1} parent=39 // pred_region
          %s556 = smul.u32 2, %s34
          %s558 = ssub.s32 256, 256
          %559 = vsyncadd %s544, %s558
          %s560 = smul.addr %s33, 4
          %s561 = sadd.s32 %s556, %s560
          %s562 = smul.addr %s561, 128
          %s563 = scalar_lea.hbm %s5, %s562
          %s564 = sshll.u32 %s547, 4
          %s565 = int_to_ptr.vmem [resolvable:$true] %s564
          %570 = dma.vmem_to_hbm [thread:$0]  %s565, 256, %s563, %s544, 128, 128, 8
        $region64: #{tpu_custom_call.1} parent=39 // pred_fallthru
          _
        // Predicated region
        $region65: #{tpu_custom_call.1} parent=39 // pred_check
          %p571 = pneg %p201
        $region66: #{tpu_custom_call.1} parent=39 // pred_check_branch
          %573 = sbr.rel (%p571) target = $region68
        $region67: #{tpu_custom_call.1} parent=39 // pred_region
          %s574 = smul.u32 2, %s34
          %s576 = ssub.s32 256, 256
          %577 = vsyncadd %s549, %s576
          %s578 = smul.addr %s33, 4
          %s579 = sadd.s32 %s574, %s578
          %s580 = smul.addr %s579, 128
          %s581 = scalar_lea.hbm %s6, %s580
          %s582 = sshll.u32 %s552, 4
          %s583 = int_to_ptr.vmem [resolvable:$true] %s582
          %588 = dma.vmem_to_hbm [thread:$0]  %s583, 256, %s581, %s549, 128, 128, 8
        $region68: #{tpu_custom_call.1} parent=39 // pred_fallthru
          _
      $region40: #{tpu_custom_call.1} parent=5 // pred_fallthru
        _
      %p589 = scmp.le.s32.totalorder 2, %s24
      // Predicated region
      $region69: #{tpu_custom_call.1} parent=5 // pred_check
        %p590 = pneg %p589
      $region70: #{tpu_custom_call.1} parent=5 // pred_check_branch
        %592 = sbr.rel (%p590) target = $region72
      $region71: #{tpu_custom_call.1} parent=5 // pred_region
        %s593 = ssub.s32 %s24, 2
        // Predicated region
        $region73: #{tpu_custom_call.1} parent=71 // pred_check
          %p594 = pneg %p179
        $region74: #{tpu_custom_call.1} parent=71 // pred_check_branch
          %596 = sbr.rel (%p594) target = $region76
        $region75: #{tpu_custom_call.1} parent=71 // pred_region
          %s597 = sand.u32 %s164, 1
          %s598 = scalar_lea.sflag [#allocation4], %s597
          %s599 = sand.u32 %s164, 1
          %s600 = smul.addr %s599, 16
          %s601 = scalar_lea.vmem [#allocation11], %s600
          %602 = dma.done %s598, 256
        $region76: #{tpu_custom_call.1} parent=71 // pred_fallthru
          _
        // Predicated region
        $region77: #{tpu_custom_call.1} parent=71 // pred_check
          %p603 = pneg %p207
        $region78: #{tpu_custom_call.1} parent=71 // pred_check_branch
          %605 = sbr.rel (%p603) target = $region80
        $region79: #{tpu_custom_call.1} parent=71 // pred_region
          %s606 = sand.u32 %s192, 1
          %s607 = scalar_lea.sflag [#allocation13], %s606
          %s608 = sand.u32 %s192, 1
          %s609 = smul.addr %s608, 16
          %s610 = scalar_lea.vmem [#allocation12], %s609
          %611 = dma.done %s607, 256
        $region80: #{tpu_custom_call.1} parent=71 // pred_fallthru
          _
      $region72: #{tpu_custom_call.1} parent=5 // pred_fallthru
        _
    $region6: #{tpu_custom_call.1} parent=1 // loop_footer
      %s28 = sadd.s32 1, %s24
    $region7: #{tpu_custom_call.1} parent=1 // loop_footer_branch
      %23 = sbr.rel target = $region3
    $region8: #{tpu_custom_call.1} parent=1 // loop_exit
      _
    %612 = vsyncpa [#allocation3], 1
    %s613 = scalar_lea.sflag [#allocation3], 1
    %614 = vsyncpa %s613, 1
    %615 = vsyncpa [#allocation6], 1
    %616 = vsyncpa [#allocation9], 1
    %617 = vsyncpa [#allocation4], 1
    %s618 = scalar_lea.sflag [#allocation4], 1
    %619 = vsyncpa %s618, 1
    %620 = vsyncpa [#allocation13], 1
    %s621 = scalar_lea.sflag [#allocation13], 1
    %622 = vsyncpa %s621, 1

</llo_original>
